<compile_context>
chip_gen: v7x
topology: tpu7x:2x2x1
jax: 0.10.0
libtpu: 0.0.40
codegen_flags: <defaults>
</compile_context>

<pallas_src>
import functools

import jax
import jax.numpy as jnp
from jax.experimental import pallas as pl
from jax.experimental.pallas import tpu as pltpu

_SUBLANES = 8


def _mel_loss_kernel(real_ref, gen_ref, out_ref, acc_ref, *,
                     rows_valid, tile_rows, blocks_per_split, fold,
                     needs_mask, inv_scale):
    c = pl.program_id(0)   # core-split axis ("parallel")
    i = pl.program_id(1)   # row-block reduction axis ("arbitrary")

    @pl.when(i == 0)
    def _():
        acc_ref[...] = jnp.zeros_like(acc_ref)

    # Native-dtype blocks -> f32 on the VPU before subtract (v5e-safe; the
    # accumulation is always f32).
    a = real_ref[...].astype(jnp.float32)
    b = gen_ref[...].astype(jnp.float32)
    diff = jnp.abs(a - b)

    if needs_mask:
        # Mask rows past the true extent.  The logical row-block index
        # (c*blocks_per_split + i) may exceed the clamped index used by the
        # index_map (tail block / dummy block of the core split); in that
        # case the mask is all-False and the block contributes 0.
        start = (c * blocks_per_split + i) * tile_rows
        row_ids = start + jax.lax.broadcasted_iota(jnp.int32, (tile_rows, 1), 0)
        diff = jnp.where(row_ids < rows_valid, diff, 0.0)

    # Fold the row tile onto an 8-sublane-tall accumulator: pure VPU adds,
    # no per-step cross-lane reduce and no per-step (1,1) RMW.
    acc_rows = tile_rows // fold
    acc_ref[...] += diff.reshape(fold, acc_rows, diff.shape[-1]).sum(axis=0)

    @pl.when(i == pl.num_programs(1) - 1)
    def _():
        out_ref[...] = (jnp.sum(acc_ref[...]) * inv_scale).reshape(1, 1)


def mel_loss(mel_real, mel_gen, *, target_block_bytes=2 << 20, num_splits=2):
    """45 * mean(|mel_real - mel_gen|), computed in a Pallas TPU kernel."""
    assert mel_real.shape == mel_gen.shape, (mel_real.shape, mel_gen.shape)
    shape = mel_real.shape
    n_elems = 1
    for d in shape:
        n_elems *= d
    T = shape[-1]
    R = n_elems // T

    # Free views of the contiguous data: no padding, no dtype cast in HBM.
    real2d = mel_real.reshape(R, T)
    gen2d = mel_gen.reshape(R, T)

    itemsize = max(jnp.dtype(mel_real.dtype).itemsize,
                   jnp.dtype(mel_gen.dtype).itemsize)
    row_bytes = T * itemsize

    # Row tile: ~target_block_bytes per input block, multiple of 8 sublanes,
    # never larger than the (sublane-rounded) row count.
    if R >= _SUBLANES:
        tr = (target_block_bytes // row_bytes) // _SUBLANES * _SUBLANES
        tr = max(_SUBLANES, tr)
        r_ceil = pl.cdiv(R, _SUBLANES) * _SUBLANES
        tr = min(tr, r_ceil)
        fold = tr // _SUBLANES
    else:
        tr = R          # full (tiny) row extent in a single block
        fold = 1

    nb = pl.cdiv(R, tr)                       # number of real row blocks
    num_splits = max(1, min(num_splits, nb))  # core-split axis (v7x: 2 TCs)
    blocks_per_split = pl.cdiv(nb, num_splits)

    # Mask is only needed when some block carries rows past R (tail block) or
    # when a core split gets a clamped dummy block.  Static decision: the
    # aligned common case traces a mask-free inner loop.
    needs_mask = (R % tr != 0) or (blocks_per_split * num_splits != nb)

    grid = (num_splits, blocks_per_split)
    inv_scale = 45.0 / float(n_elems)
    kernel = functools.partial(
        _mel_loss_kernel,
        rows_valid=R,
        tile_rows=tr,
        blocks_per_split=blocks_per_split,
        fold=fold,
        needs_mask=needs_mask,
        inv_scale=inv_scale,
    )

    def in_map(c, i):
        # Clamp overflow block indices of the split; they are masked to 0
        # inside the kernel.
        return (jnp.minimum(c * blocks_per_split + i, nb - 1), 0)

    partials = pl.pallas_call(
        kernel,
        out_shape=jax.ShapeDtypeStruct((num_splits, 1), jnp.float32),
        grid_spec=pltpu.PrefetchScalarGridSpec(
            num_scalar_prefetch=0,
            grid=grid,
            in_specs=[
                pl.BlockSpec((tr, T), in_map),
                pl.BlockSpec((tr, T), in_map),
            ],
            out_specs=pl.BlockSpec((1, 1), lambda c, i: (c, 0)),
            scratch_shapes=[pltpu.VMEM((tr // fold, T), jnp.float32)],
        ),
        compiler_params=pltpu.CompilerParams(
            dimension_semantics=("parallel", "arbitrary"),
        ),
    )(real2d, gen2d)

    return jnp.sum(partials)


if __name__ == "__main__":
    key = jax.random.PRNGKey(0)
    k1, k2, k3, k4, k5, k6 = jax.random.split(key, 6)

    # 1) Small mel-spectrogram-like shapes: batch=2, n_mels=8, frames=96.
    #    (Aligned case: no in-kernel mask is traced.)
    a1 = jax.random.normal(k1, (2, 8, 96), dtype=jnp.float32)
    b1 = jax.random.normal(k2, (2, 8, 96), dtype=jnp.float32)
    out1 = jax.block_until_ready(mel_loss(a1, b1))
    ref1 = 45.0 * jnp.mean(jnp.abs(a1 - b1))
    assert jnp.allclose(out1, ref1, rtol=1e-5, atol=1e-5), (out1, ref1)

    # 2) Odd shape + tiny block target to exercise the multi-block grid, the
    #    tail-row mask and the two-way core split with a clamped dummy block.
    a2 = jax.random.normal(k3, (3, 80, 101), dtype=jnp.float32)
    b2 = jax.random.normal(k4, (3, 80, 101), dtype=jnp.float32)
    out2 = jax.block_until_ready(mel_loss(a2, b2, target_block_bytes=8192))
    ref2 = 45.0 * jnp.mean(jnp.abs(a2 - b2))
    assert jnp.allclose(out2, ref2, rtol=1e-5, atol=1e-5), (out2, ref2)

    # 3) Native bf16 inputs (cast to f32 inside the kernel, f32 accumulate).
    a3 = jax.random.normal(k5, (2, 8, 96), dtype=jnp.bfloat16)
    b3 = jax.random.normal(k6, (2, 8, 96), dtype=jnp.bfloat16)
    out3 = jax.block_until_ready(mel_loss(a3, b3))
    ref3 = 45.0 * jnp.mean(
        jnp.abs(a3.astype(jnp.float32) - b3.astype(jnp.float32)))
    assert jnp.allclose(out3, ref3, rtol=1e-4, atol=1e-4), (out3, ref3)

    print("KERNEL_OK")
</pallas_src>

<mosaic_0001>
module attributes {stable_mosaic.version = 11 : i64} {
  func.func @_mel_loss_kernel(%arg0: i32, %arg1: i32, %arg2: memref<16x96xf32, #tpu.memory_space<vmem>>, %arg3: memref<16x96xf32, #tpu.memory_space<vmem>>, %arg4: memref<1x1xf32, #tpu.memory_space<vmem>>, %arg5: memref<8x96xf32, #tpu.memory_space<vmem>>) attributes {dimension_semantics = [#tpu.dimension_semantics<parallel>, #tpu.dimension_semantics<arbitrary>], iteration_bounds = array<i64: 1, 1>, scalar_prefetch = 0 : i64, scratch_operands = 1 : i64, tpu.core_type = #tpu.core_type<tc>, window_params = [{transform_indices = @transform_0, window_bounds = array<i64: 16, 96>}, {transform_indices = @transform_1, window_bounds = array<i64: 16, 96>}, {transform_indices = @transform_2, window_bounds = array<i64: 1, 1>}]} {
    %c0_i32 = arith.constant 0 : i32
    %0 = arith.cmpi eq, %arg1, %c0_i32 : i32
    %1 = arith.extui %0 : i1 to i32
    %c0_i32_0 = arith.constant 0 : i32
    %2 = arith.cmpi ne, %1, %c0_i32_0 : i32
    scf.if %2 {
      %cst_10 = arith.constant 0.000000e+00 : f32
      %15 = vector.broadcast %cst_10 : f32 to vector<8x96xf32>
      %c0_11 = arith.constant 0 : index
      %c0_12 = arith.constant 0 : index
      %16 = vector.load %arg5[%c0_11, %c0_12] : memref<8x96xf32, #tpu.memory_space<vmem>>, vector<8x96xf32>
      tpu.vector_store %arg5[%c0_11, %c0_12], %15 {strides = array<i32>} : memref<8x96xf32, #tpu.memory_space<vmem>>, vector<8x96xf32>,
    } else {
    }
    %c0 = arith.constant 0 : index
    %c0_1 = arith.constant 0 : index
    %3 = vector.load %arg2[%c0, %c0_1] : memref<16x96xf32, #tpu.memory_space<vmem>>, vector<16x96xf32>
    %c0_2 = arith.constant 0 : index
    %c0_3 = arith.constant 0 : index
    %4 = vector.load %arg3[%c0_2, %c0_3] : memref<16x96xf32, #tpu.memory_space<vmem>>, vector<16x96xf32>
    %5 = arith.subf %3, %4 : vector<16x96xf32>
    %6 = math.absf %5 : vector<16x96xf32>
    %c0_4 = arith.constant 0 : index
    %c0_5 = arith.constant 0 : index
    %7 = vector.load %arg5[%c0_4, %c0_5] : memref<8x96xf32, #tpu.memory_space<vmem>>, vector<8x96xf32>
    %8 = vector.shape_cast %6 : vector<16x96xf32> to vector<2x8x96xf32>
    %cst = arith.constant dense<0.000000e+00> : vector<8x96xf32>
    %9 = vector.multi_reduction <add>, %8, %cst [0] : vector<2x8x96xf32> to vector<8x96xf32>
    %10 = arith.addf %7, %9 : vector<8x96xf32>
    %c0_6 = arith.constant 0 : index
    %c0_7 = arith.constant 0 : index
    %11 = vector.load %arg5[%c0_6, %c0_7] : memref<8x96xf32, #tpu.memory_space<vmem>>, vector<8x96xf32>
    tpu.vector_store %arg5[%c0_6, %c0_7], %10 {strides = array<i32>} : memref<8x96xf32, #tpu.memory_space<vmem>>, vector<8x96xf32>,
    %c0_i32_8 = arith.constant 0 : i32
    %12 = arith.cmpi eq, %arg1, %c0_i32_8 : i32
    %13 = arith.extui %12 : i1 to i32
    %c0_i32_9 = arith.constant 0 : i32
    %14 = arith.cmpi ne, %13, %c0_i32_9 : i32
    scf.if %14 {
      %c0_10 = arith.constant 0 : index
      %c0_11 = arith.constant 0 : index
      %15 = vector.load %arg5[%c0_10, %c0_11] : memref<8x96xf32, #tpu.memory_space<vmem>>, vector<8x96xf32>
      %16 = vector.shape_cast %15 : vector<8x96xf32> to vector<1x8x96xf32>
      %cst_12 = arith.constant dense<0.000000e+00> : vector<1xf32>
      %17 = vector.multi_reduction <add>, %16, %cst_12 [1, 2] : vector<1x8x96xf32> to vector<1xf32>
      %18 = vector.shape_cast %17 : vector<1xf32> to vector<1x1x1xf32>
      %19 = vector.extract %18[0, 0, 0] : f32 from vector<1x1x1xf32>
      %cst_13 = arith.constant 0.029296875 : f32
      %20 = arith.mulf %19, %cst_13 : f32
      %21 = vector.broadcast %20 : f32 to vector<1x1xf32>
      %c0_14 = arith.constant 0 : index
      %c0_15 = arith.constant 0 : index
      %22 = vector.load %arg4[%c0_14, %c0_15] : memref<1x1xf32, #tpu.memory_space<vmem>>, vector<1x1xf32>
      tpu.vector_store %arg4[%c0_14, %c0_15], %21 {strides = array<i32>} : memref<1x1xf32, #tpu.memory_space<vmem>>, vector<1x1xf32>,
    } else {
    }
    return
  }
  func.func @transform_0(%arg0: i32, %arg1: i32) -> (i32, i32) {
    %c1_i32 = arith.constant 1 : i32
    %0 = arith.muli %arg0, %c1_i32 : i32
    %1 = arith.addi %0, %arg1 : i32
    %c0_i32 = arith.constant 0 : i32
    %2 = arith.minsi %1, %c0_i32 : i32
    %c0_i32_0 = arith.constant 0 : i32
    %c0_i32_1 = arith.constant 0 : i32
    return %2, %c0_i32_0 : i32, i32
  }
  func.func @transform_1(%arg0: i32, %arg1: i32) -> (i32, i32) {
    %c1_i32 = arith.constant 1 : i32
    %0 = arith.muli %arg0, %c1_i32 : i32
    %1 = arith.addi %0, %arg1 : i32
    %c0_i32 = arith.constant 0 : i32
    %2 = arith.minsi %1, %c0_i32 : i32
    %c0_i32_0 = arith.constant 0 : i32
    %c0_i32_1 = arith.constant 0 : i32
    return %2, %c0_i32_0 : i32, i32
  }
  func.func @transform_2(%arg0: i32, %arg1: i32) -> (i32, i32) {
    %c0_i32 = arith.constant 0 : i32
    %c0_i32_0 = arith.constant 0 : i32
    return %arg0, %c0_i32 : i32, i32
  }
}

</mosaic_0001>

<llo_original>
// kernel: tpu_custom_call.1
$region0: #{tpu_custom_call.1}
  #allocation0 [shape = 'u32[]', space=smem, size = 0x4, offset = 0x4, fixed_abs, tag = 'smem constant byte address 0x4 - core index']
  #allocation1 [shape = 'u32[144,128]{1,0:T(1,128)}', space=vmem, size = 0x12000, scoped, tag = 'internal scratch']
  #allocation2 [shape = 'f32[8,96]{1,0:T(8,128)}', space=vmem, size = 0x1000, scoped, tag = 'scratch operand']
  %s0 = inlined_call_operand.hbm [shape: f32[16,96], index: 0, kind: input, shape index: {}]
  %s1 = inlined_call_operand.hbm [shape: f32[16,96], index: 1, kind: input, shape index: {}]
  %s2 = inlined_call_operand.hbm [shape: f32[1,1], index: 2, kind: output, shape index: {}]
  %s3 = sld [smem:[#allocation0]]
  $region34: #{tpu_custom_call.1} parent=0
    _
  %s5 = ssub.s32 1, %s3
  %s6 = scalar_select 0, %s5, %s3
  $region1: #{tpu_custom_call.1} parent=0
    #allocation3 [shape = 'u8[8192]{0}', space=vmem, size = 0x2000, scoped, tag = 'input window, operand 0, single buffered']
    #allocation4 [shape = 's32[1]{0}', space=sflag, size = 0x4, scoped, tag = 'scoped memory for tpu_custom_call.1']
    #allocation5 [shape = 's32[1]{0}', space=sflag, size = 0x4, scoped, tag = 'scoped memory for tpu_custom_call.1']
    #allocation6 [shape = 'u8[8192]{0}', space=vmem, size = 0x2000, scoped, tag = 'input window, operand 1, single buffered']
    #allocation7 [shape = 's32[1]{0}', space=sflag, size = 0x4, scoped, tag = 'scoped memory for tpu_custom_call.1']
    #allocation8 [shape = 'u8[512]{0}', space=vmem, size = 0x400, scoped, tag = 'output window, operand 0, single buffered']
    %7 = vsyncpa [#allocation4], 0
    %8 = vsyncpa [#allocation7], 0
    %9 = vsyncpa [#allocation5], 0
    // Predicated region
    $region2: #{tpu_custom_call.1} parent=1 // pred_check
      _
    $region3: #{tpu_custom_call.1} parent=1 // pred_check_branch
      %11 = sbr.rel (0) target = $region5
    $region4: #{tpu_custom_call.1} parent=1 // pred_region
      %s12 = sadd.s32 0, 0
      %p13 = scmp.lt.s32.totalorder %s12, 0
      %s14 = scalar_select %p13, %s12, 0
      %s15 = smul.u32 2, %s14
      %s17 = ssub.s32 256, 256
      %18 = vsyncadd [#allocation4], %s17
      %s19 = smul.addr %s15, 128
      %s20 = scalar_lea.hbm %s0, %s19
      %s21 = sshll.u32 [#allocation3], 4
      %s22 = int_to_ptr.vmem [resolvable:$true] %s21
      %27 = dma.hbm_to_vmem [thread:$0]  %s20, 256, %s22, [#allocation4], 128, 128, 8
    $region5: #{tpu_custom_call.1} parent=1 // pred_fallthru
      _
    // Predicated region
    $region6: #{tpu_custom_call.1} parent=1 // pred_check
      _
    $region7: #{tpu_custom_call.1} parent=1 // pred_check_branch
      %29 = sbr.rel (0) target = $region9
    $region8: #{tpu_custom_call.1} parent=1 // pred_region
      %s30 = sadd.s32 0, 0
      %p31 = scmp.lt.s32.totalorder %s30, 0
      %s32 = scalar_select %p31, %s30, 0
      %s33 = smul.u32 2, %s32
      %s35 = ssub.s32 256, 256
      %36 = vsyncadd [#allocation7], %s35
      %s37 = smul.addr %s33, 128
      %s38 = scalar_lea.hbm %s1, %s37
      %s39 = sshll.u32 [#allocation6], 4
      %s40 = int_to_ptr.vmem [resolvable:$true] %s39
      %45 = dma.hbm_to_vmem [thread:$0]  %s38, 256, %s40, [#allocation7], 128, 128, 8
    $region9: #{tpu_custom_call.1} parent=1 // pred_fallthru
      _
    // Predicated region
    $region10: #{tpu_custom_call.1} parent=1 // pred_check
      _
    $region11: #{tpu_custom_call.1} parent=1 // pred_check_branch
      %47 = sbr.rel (0) target = $region13
    $region12: #{tpu_custom_call.1} parent=1 // pred_region
      %48 = dma.done [#allocation4], 256
    $region13: #{tpu_custom_call.1} parent=1 // pred_fallthru
      _
    // Predicated region
    $region14: #{tpu_custom_call.1} parent=1 // pred_check
      _
    $region15: #{tpu_custom_call.1} parent=1 // pred_check_branch
      %50 = sbr.rel (0) target = $region17
    $region16: #{tpu_custom_call.1} parent=1 // pred_region
      %51 = dma.done [#allocation7], 256
    $region17: #{tpu_custom_call.1} parent=1 // pred_fallthru
      _
    %s52 = sadd.s32 0, 0
    %p53 = scmp.lt.s32.totalorder %s52, 0
    %s54 = scalar_select %p53, %s52, 0
    %s55 = smul.u32 2, %s54
    %s56 = sadd.s32 0, 0
    %p57 = scmp.lt.s32.totalorder %s56, 0
    %s58 = scalar_select %p57, %s56, 0
    %s59 = smul.u32 2, %s58
    %p60 = scmp.eq.s32.totalorder 0, 0
    // Predicated region
    $region18: #{tpu_custom_call.1} parent=1 // pred_check
      %p61 = pneg %p60
    $region19: #{tpu_custom_call.1} parent=1 // pred_check_branch
      %63 = sbr.rel (%p61) target = $region21
    $region20: #{tpu_custom_call.1} parent=1 // pred_region
      %vm64 = vcmask 785408
      %65 = vst.msk [vmem:[#allocation2] sm:$0xff] %vm64, 0.0
    $region21: #{tpu_custom_call.1} parent=1 // pred_fallthru
      _
    %v66 = vld [vmem:[#allocation3] sm:$0xff]
    %v67 = vld [vmem:[#allocation3 + $0x8] sm:$0xff]
    %v68 = vld [vmem:[#allocation6] sm:$0xff]
    %v69 = vld [vmem:[#allocation6 + $0x8] sm:$0xff]
    %v70 = vsub.f32 %v66, %v68
    %v71 = vsub.f32 %v67, %v69
    %v72 = vand.u32 2147483647, %v70
    %v73 = vand.u32 2147483647, %v71
    %v74 = vld [vmem:[#allocation2] sm:$0xff]
    %vm75 = vcmask 785408
    %v76 = vsel %vm75, %v72, 0.0
    %v77 = vsel %vm75, %v73, 0.0
    %v78 = vadd.f32 %v76, %v77
    %v79 = vadd.f32 %v74, %v78
    %80 = vst.msk [vmem:[#allocation2] sm:$0xff] %vm75, %v79
    // Predicated region
    $region22: #{tpu_custom_call.1} parent=1 // pred_check
      %p81 = pneg %p60
    $region23: #{tpu_custom_call.1} parent=1 // pred_check_branch
      %83 = sbr.rel (%p81) target = $region25
    $region24: #{tpu_custom_call.1} parent=1 // pred_region
      %v84 = vld [vmem:[#allocation2] sm:$0xff]
      %v85 = vsel %vm75, %v84, 0.0
      %86 = vadd.xlane.f32.xlu0 %v85
      %v87 = vpop.xlane.xlu0 %86
      %v88 = vrot.slane %v87, 4
      %v89 = vadd.f32 %v87, %v88
      %v90 = vrot.slane %v89, 2
      %v91 = vadd.f32 %v89, %v90
      %v92 = vrot.slane %v91, 1
      %v93 = vadd.f32 %v91, %v92
      %s94 = vtos %v93
      %s95 = smul.f32 %s94, 0.029296875
      %v96 = vstv %s95
      %vm97 = vcmask 0
      %98 = vst.msk [vmem:[#allocation8] sm:$0x1] %vm97, %v96
    $region25: #{tpu_custom_call.1} parent=1 // pred_fallthru
      _
    // Predicated region
    $region26: #{tpu_custom_call.1} parent=1 // pred_check
      _
    $region27: #{tpu_custom_call.1} parent=1 // pred_check_branch
      %100 = sbr.rel (0) target = $region29
    $region28: #{tpu_custom_call.1} parent=1 // pred_region
      %s102 = ssub.s32 16, 16
      %103 = vsyncadd [#allocation5], %s102
      %s105 = sshll.u32 [#allocation8], 4
      %s106 = int_to_ptr.vmem [resolvable:$true] %s105
      %108 = dma.vmem_to_hbm [thread:$0]  %s106, 16, %s2, [#allocation5]
    $region29: #{tpu_custom_call.1} parent=1 // pred_fallthru
      _
    // Predicated region
    $region30: #{tpu_custom_call.1} parent=1 // pred_check
      _
    $region31: #{tpu_custom_call.1} parent=1 // pred_check_branch
      %110 = sbr.rel (0) target = $region33
    $region32: #{tpu_custom_call.1} parent=1 // pred_region
      %111 = dma.done [#allocation5], 16
    $region33: #{tpu_custom_call.1} parent=1 // pred_fallthru
      _
    %112 = vsyncpa [#allocation4], 1
    %113 = vsyncpa [#allocation7], 1
    %114 = vsyncpa [#allocation5], 1

</llo_original>
